<compile_context>
chip_gen: v5e
topology: v5e:2x2
jax: 0.10.0
libtpu: 0.0.40
codegen_flags: <defaults>
</compile_context>

<pallas_src>
import functools

import jax
import jax.numpy as jnp
import numpy as np
from jax.experimental import pallas as pl
from jax.experimental.pallas import tpu as pltpu

# ---- static module hyper-parameters (from the PyTorch __init__ signature) ----
LSSI_MODEL_THRESH = -10.0          # constant from modular_splicing...lssi_in_model
NUM_MOTIFS = 8                     # num_motifs -> underlying model emits num_motifs - 1
KERNEL_WIDTH = 5                   # conv width used by the synthetic sub-models
SHIFT_DONOR_AMOUNT = 2             # shift_donor_amount
SUPPRESSION_OFFSETS = (-2, 0, 3)   # suppression_offsets
MASK_ABOVE_THRESHOLD = 10.05       # mask_above_threshold
DONOR_SPARSITY_MULTIPLIER = 1.0    # donor_sparsity_multiplier (unused in forward)

N_CONV = (NUM_MOTIFS - 1) + 2      # fused conv output channels: 7 motif + 2 splicepoint
PAD_L = (KERNEL_WIDTH - 1) // 2    # 'same' conv left pad
HALO = 128                         # per-tile halo, kept at 128 so every HBM/VMEM slice
                                   # stays lane-aligned; amortised by the larger tile.

# Halo-safety static checks (roll-wrap contamination + shift/suppression reach).
_MAX_REACH = PAD_L + max(abs(o) for o in SUPPRESSION_OFFSETS)   # = 5
assert HALO % 128 == 0
assert HALO >= _MAX_REACH + PAD_L
assert HALO >= SHIFT_DONOR_AMOUNT + PAD_L

# TODO(synk): underlying_motif_model_spec / original_donor_spec are external model
# constructors; they are stood in by a conv(+ReLU) motif model and a conv
# splicepoint model with the correct output shapes.


def _donor_separating_kernel(x_hbm, w_ref, bias_ref, out_ref, mask_ref,
                             xbuf, sem, *, seq_len):
    """One (batch, L-tile) grid step.

    x_hbm:   (B, C, lp + 2*HALO) bf16, HBM (memory_space=pl.ANY)
    w_ref:   (N_CONV, K*C) f32 fused conv weight
    bias_ref:(N_CONV, 1)  f32 fused conv bias
    out_ref: (1, 8, lt)   f32 — 7 masked motifs + shifted-donor channel
    mask_ref:(1, 1, lt)   i32 — padded_mask (0/1)
    xbuf:    (C, lt + 2*HALO) bf16 VMEM scratch (haloed input window)
    sem:     scalar DMA semaphore
    """
    lt = out_ref.shape[2]
    w_ext = xbuf.shape[1]                     # lt + 2*HALO
    b = pl.program_id(0)
    t = pl.program_id(1)

    # Manual DMA of this tile's haloed window straight from the padded HBM
    # array — no materialised overlapping-window copy exists anywhere.
    start = pl.multiple_of(t * lt, 128)
    cp = pltpu.make_async_copy(x_hbm.at[b, :, pl.ds(start, w_ext)], xbuf, sem)
    cp.start()
    cp.wait()

    xw = xbuf[...].astype(jnp.float32)        # (C, w_ext); one-hot exact in bf16

    # Fused conv (7 motif + 2 splicepoint channels): build the K lane-rolled
    # taps once (XLU slot) and do ONE (N_CONV, K*C) x (K*C, w_ext) matmul.
    # Tap k reads x[pos + k - PAD_L]; wrapped lanes only touch the outer
    # PAD_L lanes of the halo, which are never used (HALO >= reach + PAD_L).
    taps = []
    for k in range(KERNEL_WIDTH):
        sh = (PAD_L - k) % w_ext
        taps.append(pltpu.roll(xw, shift=sh, axis=1) if sh else xw)
    stacked = jnp.concatenate(taps, axis=0)   # (K*C, w_ext), row order k*C + c
    acc = jnp.dot(w_ref[...], stacked, preferred_element_type=jnp.float32)
    acc = acc + bias_ref[...]                 # (N_CONV, w_ext)

    # Donor score from the LAST splicepoint channel (splicepoints[:, :, -1]).
    donors_ext = jnp.maximum(acc[N_CONV - 1:N_CONV, :] - LSSI_MODEL_THRESH, 0.0)

    # Zero donors at global positions outside [0, seq_len) (matches the zero
    # padding semantics of shift_right / pad_mask in the original module).
    lane = jax.lax.broadcasted_iota(jnp.int32, (1, w_ext), 1)
    gpos = lane + (t * lt - HALO)
    valid = jnp.logical_and(gpos >= 0, gpos < seq_len)
    donors_ext = jnp.where(valid, donors_ext, 0.0)
    dmask_ext = (donors_ext > MASK_ABOVE_THRESHOLD).astype(jnp.float32)

    c0 = HALO                                  # local index of global tile start

    # shift_right(donors, shift_donor_amount): static lane-shifted slice.
    donors_shifted = donors_ext[:, c0 - SHIFT_DONOR_AMOUNT:
                                c0 - SHIFT_DONOR_AMOUNT + lt]            # (1, lt)

    # pad_mask: OR of donor_mask at offsets {-o for o in suppression_offsets}.
    sup = jnp.zeros((1, lt), jnp.float32)
    for off in SUPPRESSION_OFFSETS:
        idx = -off
        sup = sup + dmask_ext[:, c0 + idx: c0 + idx + lt]
    mask_f = (sup > 0.0).astype(jnp.float32)                             # (1, lt)

    # motifs = relu(conv) * (~padded_mask)
    motifs = jnp.maximum(acc[0:NUM_MOTIFS - 1, c0:c0 + lt], 0.0)         # (7, lt)
    motifs = motifs * (1.0 - mask_f)

    # Single lane-dense, 8-sublane-aligned store for the float channels and a
    # separate integer store for the mask (no float 0/1 round-trip).
    out_ref[0, :, :] = jnp.concatenate([motifs, donors_shifted], axis=0)  # (8, lt)
    mask_ref[0, :, :] = mask_f.astype(jnp.int32)                          # (1, lt)


def init_params(key):
    C, K, M = 4, KERNEL_WIDTH, NUM_MOTIFS
    k1, k2, k3, k4 = jax.random.split(key, 4)
    wm = jax.random.normal(k1, (K * C, M - 1), jnp.float32) * 0.1
    bm = jax.random.normal(k2, (1, M - 1), jnp.float32) * 0.1
    ws = jax.random.normal(k3, (K * C, 2), jnp.float32) * 0.1
    bs = jax.random.normal(k4, (1, 2), jnp.float32) * 0.1
    return wm, bm, ws, bs


def donor_separating_motif_forward(x, params, l_tile=4096):
    """Forward pass. x: dict with 'x' or array (B, L, 4). Returns dict like the module."""
    if isinstance(x, dict):
        x = x["x"]
    wm, bm, ws, bs = params
    B, L, C = x.shape
    K, M = KERNEL_WIDTH, NUM_MOTIFS

    def _round_up(v, m):
        return -(-v // m) * m

    lt = max(128, min(_round_up(l_tile, 128), _round_up(L, 128)))
    if B == 1 and L > 128:
        # v7x has 2 TensorCores: keep >= 2 grid points even for a single batch.
        lt = max(128, min(lt, _round_up(_round_up(L, 128) // 2, 128)))
    n_lt = -(-L // lt)
    lp = n_lt * lt
    w_ext = lt + 2 * HALO

    # Fused conv weights: stacked-tap row order is (k, c) -> k*C + c, matching
    # torch's unfold/concat layout, so W_fused = concat([wm, ws], 1).T.
    wcat = jnp.concatenate([wm, ws], axis=1)                       # (K*C, N_CONV)
    w_fused = jnp.transpose(wcat)                                  # (N_CONV, K*C)
    b_fused = jnp.concatenate([bm, bs], axis=1).reshape(N_CONV, 1)

    # Channels-major, bf16 (exact for one-hot inputs), ONE zero pad supplying
    # conv 'same' zeros + shift fill + per-tile halos. The kernel DMAs each
    # haloed window directly out of this array (no overlapping-window copy).
    x_ncl = jnp.transpose(x, (0, 2, 1)).astype(jnp.bfloat16)       # (B, C, L)
    xp = jnp.pad(x_ncl, ((0, 0), (0, 0), (HALO, lp - L + HALO)))   # (B, C, lp+2H)

    kernel = functools.partial(_donor_separating_kernel, seq_len=L)

    out, mask = pl.pallas_call(
        kernel,
        out_shape=(jax.ShapeDtypeStruct((B, M, lp), jnp.float32),
                   jax.ShapeDtypeStruct((B, 1, lp), jnp.int32)),
        grid_spec=pltpu.PrefetchScalarGridSpec(
            num_scalar_prefetch=0,
            grid=(B, n_lt),
            in_specs=[
                pl.BlockSpec(memory_space=pl.ANY),                     # x stays in HBM
                pl.BlockSpec((N_CONV, K * C), lambda b, t: (0, 0)),
                pl.BlockSpec((N_CONV, 1), lambda b, t: (0, 0)),
            ],
            out_specs=[
                pl.BlockSpec((1, M, lt), lambda b, t: (b, 0, t)),
                pl.BlockSpec((1, 1, lt), lambda b, t: (b, 0, t)),
            ],
            scratch_shapes=[
                pltpu.VMEM((C, w_ext), jnp.bfloat16),
                pltpu.SemaphoreType.DMA(()),
            ]),
        compiler_params=pltpu.CompilerParams(
            dimension_semantics=("parallel", "parallel")),
    )(xp, w_fused, b_fused)

    motifs = jnp.transpose(out[:, :, :L], (0, 2, 1))               # (B, L, M)
    padded_mask = mask[:, 0, :L] > 0                               # (B, L) bool
    return {"motifs": motifs, "padded_mask": padded_mask}


def reference_forward(x, params):
    """Pure-JAX replica of the PyTorch forward (for verification)."""
    if isinstance(x, dict):
        x = x["x"]
    wm, bm, ws, bs = params
    B, L, C = x.shape
    K = KERNEL_WIDTH
    pad_l = (K - 1) // 2
    pad_r = K - 1 - pad_l
    xp = jnp.pad(x, ((0, 0), (pad_l, pad_r), (0, 0)))
    cols = jnp.concatenate([xp[:, k:k + L, :] for k in range(K)], axis=2)   # (B,L,K*C)
    hp = jax.lax.Precision.HIGHEST
    motifs = jnp.maximum(jnp.einsum("blk,kn->bln", cols, wm, precision=hp) + bm, 0.0)
    splice = jnp.einsum("blk,kn->bln", cols, ws, precision=hp) + bs
    donors = jnp.maximum(splice[:, :, -1] - LSSI_MODEL_THRESH, 0.0)         # (B, L)
    s = SHIFT_DONOR_AMOUNT
    donors_shifted = jnp.pad(donors, ((0, 0), (s, 0)))[:, :L]
    donor_mask = donors > MASK_ABOVE_THRESHOLD
    indices = [-o for o in SUPPRESSION_OFFSETS]
    pad_left = min([0] + indices)
    pad_right = max([0] + indices)
    padded = jnp.pad(donor_mask, ((0, 0), (-pad_left, pad_right)))
    stacked = jnp.stack([padded[:, i - pad_left:i - pad_left + L] for i in indices])
    padded_mask = jnp.any(stacked, axis=0)
    motifs = motifs * (~padded_mask)[:, :, None].astype(jnp.float32)
    motifs = jnp.concatenate([motifs, donors_shifted[:, :, None]], axis=2)
    return {"motifs": motifs, "padded_mask": padded_mask}


if __name__ == "__main__":
    B, L, C = 2, 512, 4
    key = jax.random.PRNGKey(0)
    kp, kx = jax.random.split(key)
    params = init_params(kp)
    ids = jax.random.randint(kx, (B, L), 0, 4)
    x = jax.nn.one_hot(ids, C, dtype=jnp.float32)          # (B, L, 4) one-hot sequence

    # l_tile=256 exercises the multi-tile path (halo correctness across tile
    # boundaries); default l_tile=4096 is used for long sequences in practice.
    out = donor_separating_motif_forward({"x": x}, params, l_tile=256)
    jax.block_until_ready(out["motifs"])
    jax.block_until_ready(out["padded_mask"])

    ref = reference_forward({"x": x}, params)
    # Default MXU precision vs. HIGHEST reference; with one-hot inputs and
    # small weights the mismatch is well inside 1e-4 (accepted tolerance).
    assert np.allclose(np.asarray(out["motifs"]), np.asarray(ref["motifs"]),
                       atol=1e-4, rtol=1e-4)
    assert np.array_equal(np.asarray(out["padded_mask"]),
                          np.asarray(ref["padded_mask"]))
    print("KERNEL_OK")
</pallas_src>

<mosaic_0001>
module attributes {stable_mosaic.version = 11 : i64} {
  func.func @_donor_separating_kernel(%arg0: i32, %arg1: i32, %arg2: memref<2x4x768xbf16, #tpu.memory_space<any>>, %arg3: memref<9x20xf32, #tpu.memory_space<vmem>>, %arg4: memref<9x1xf32, #tpu.memory_space<vmem>>, %arg5: memref<1x8x256xf32, #tpu.memory_space<vmem>>, %arg6: memref<1x1x256xi32, #tpu.memory_space<vmem>>, %arg7: memref<4x512xbf16, #tpu.memory_space<vmem>>, %arg8: memref<!tpu.dma_semaphore, #tpu.memory_space<semaphore_mem>>) attributes {dimension_semantics = [#tpu.dimension_semantics<parallel>, #tpu.dimension_semantics<parallel>], iteration_bounds = array<i64: 2, 2>, scalar_prefetch = 0 : i64, scratch_operands = 2 : i64, tpu.core_type = #tpu.core_type<tc>, window_params = [{}, {pipeline_mode = #tpu.pipeline_mode<synchronous>, transform_indices = @transform_1, window_bounds = array<i64: 9, 20>}, {pipeline_mode = #tpu.pipeline_mode<synchronous>, transform_indices = @transform_2, window_bounds = array<i64: 9, 1>}, {transform_indices = @transform_3, window_bounds = array<i64: 1, 8, 256>}, {transform_indices = @transform_4, window_bounds = array<i64: 1, 1, 256>}]} {
    %c256_i32 = arith.constant 256 : i32
    %0 = arith.muli %arg1, %c256_i32 : i32
    %1 = tpu.assume_multiple %0, 128 : i32
    %c0_i32 = arith.constant 0 : i32
    %2 = tpu.memref_slice %arg2[%arg0, %c0_i32, %1] : memref<2x4x768xbf16, #tpu.memory_space<any>> -> memref<1x4x512xbf16, #tpu.memory_space<any>>
    %3 = tpu.memref_squeeze %2 : memref<1x4x512xbf16, #tpu.memory_space<any>> -> memref<4x512xbf16, #tpu.memory_space<any>>
    tpu.enqueue_dma source(%3 : memref<4x512xbf16, #tpu.memory_space<any>>) target(%arg7 : memref<4x512xbf16, #tpu.memory_space<vmem>>) target_semaphore(%arg8 : memref<!tpu.dma_semaphore, #tpu.memory_space<semaphore_mem>>)
    %c0_i32_0 = arith.constant 0 : i32
    %4 = tpu.memref_slice %arg2[%arg0, %c0_i32_0, %1] : memref<2x4x768xbf16, #tpu.memory_space<any>> -> memref<1x4x512xbf16, #tpu.memory_space<any>>
    %5 = tpu.memref_squeeze %4 : memref<1x4x512xbf16, #tpu.memory_space<any>> -> memref<4x512xbf16, #tpu.memory_space<any>>
    tpu.wait_dma2 semaphore(%arg8 : memref<!tpu.dma_semaphore, #tpu.memory_space<semaphore_mem>>) src(%5 : memref<4x512xbf16, #tpu.memory_space<any>>) dst(%arg7 : memref<4x512xbf16, #tpu.memory_space<vmem>>)
    %c0 = arith.constant 0 : index
    %c0_1 = arith.constant 0 : index
    %6 = vector.load %arg7[%c0, %c0_1] : memref<4x512xbf16, #tpu.memory_space<vmem>>, vector<4x512xbf16>
    %7 = arith.extf %6 : vector<4x512xbf16> to vector<4x512xf32>
    %c2_i32 = arith.constant 2 : i32
    %8 = tpu.dynamic_rotate %7 by %c2_i32 dim 1 : vector<4x512xf32>, i32 -> vector<4x512xf32>
    %c1_i32 = arith.constant 1 : i32
    %9 = tpu.dynamic_rotate %7 by %c1_i32 dim 1 : vector<4x512xf32>, i32 -> vector<4x512xf32>
    %c511_i32 = arith.constant 511 : i32
    %10 = tpu.dynamic_rotate %7 by %c511_i32 dim 1 : vector<4x512xf32>, i32 -> vector<4x512xf32>
    %c510_i32 = arith.constant 510 : i32
    %11 = tpu.dynamic_rotate %7 by %c510_i32 dim 1 : vector<4x512xf32>, i32 -> vector<4x512xf32>
    %12 = tpu.concatenate %8, %9, %7, %10, %11 in 0 : vector<4x512xf32>, vector<4x512xf32>, vector<4x512xf32>, vector<4x512xf32>, vector<4x512xf32> -> vector<20x512xf32>
    %c0_2 = arith.constant 0 : index
    %c0_3 = arith.constant 0 : index
    %13 = vector.load %arg3[%c0_2, %c0_3] : memref<9x20xf32, #tpu.memory_space<vmem>>, vector<9x20xf32>
    %cst = arith.constant dense<0.000000e+00> : vector<9x512xf32>
    %14 = tpu.matmul %13, %12, %cst {dimension_numbers = #tpu.dot_dimension_numbers<[1], [0], [0], [1], [0, 0, 1, 1], [], []>} : vector<9x20xf32>, vector<20x512xf32>, vector<9x512xf32> -> vector<9x512xf32>
    %c0_4 = arith.constant 0 : index
    %c0_5 = arith.constant 0 : index
    %15 = vector.load %arg4[%c0_4, %c0_5] : memref<9x1xf32, #tpu.memory_space<vmem>>, vector<9x1xf32>
    %16 = vector.broadcast %15 : vector<9x1xf32> to vector<9x512xf32>
    %17 = arith.addf %14, %16 : vector<9x512xf32>
    %18 = vector.extract_strided_slice %17 {offsets = [8, 0], sizes = [1, 512], strides = [1, 1]} : vector<9x512xf32> to vector<1x512xf32>
    %cst_6 = arith.constant -1.000000e+01 : f32
    %19 = vector.broadcast %cst_6 : f32 to vector<1x512xf32>
    %20 = arith.subf %18, %19 : vector<1x512xf32>
    %cst_7 = arith.constant 0.000000e+00 : f32
    %21 = vector.broadcast %cst_7 : f32 to vector<1x512xf32>
    %22 = arith.maximumf %20, %21 : vector<1x512xf32>
    %23 = tpu.iota {dimensions = array<i32: 1>} : vector<1x512xi32>
    %c256_i32_8 = arith.constant 256 : i32
    %24 = arith.muli %arg1, %c256_i32_8 : i32
    %c128_i32 = arith.constant 128 : i32
    %25 = arith.subi %24, %c128_i32 : i32
    %26 = vector.broadcast %25 : i32 to vector<1x512xi32>
    %27 = arith.addi %23, %26 : vector<1x512xi32>
    %c0_i32_9 = arith.constant 0 : i32
    %28 = vector.broadcast %c0_i32_9 : i32 to vector<1x512xi32>
    %29 = arith.cmpi sge, %27, %28 : vector<1x512xi32>
    %c512_i32 = arith.constant 512 : i32
    %30 = vector.broadcast %c512_i32 : i32 to vector<1x512xi32>
    %31 = arith.cmpi slt, %27, %30 : vector<1x512xi32>
    %32 = arith.andi %29, %31 : vector<1x512xi1>
    %cst_10 = arith.constant 0.000000e+00 : f32
    %33 = vector.broadcast %cst_10 : f32 to vector<1x512xf32>
    %34 = arith.select %32, %22, %33 : vector<1x512xi1>, vector<1x512xf32>
    %cst_11 = arith.constant 1.005000e+01 : f32
    %35 = vector.broadcast %cst_11 : f32 to vector<1x512xf32>
    %36 = arith.cmpf ogt, %34, %35 : vector<1x512xf32>
    %37 = arith.extui %36 : vector<1x512xi1> to vector<1x512xi32>
    %38 = arith.sitofp %37 : vector<1x512xi32> to vector<1x512xf32>
    %39 = vector.extract_strided_slice %34 {offsets = [0, 126], sizes = [1, 256], strides = [1, 1]} : vector<1x512xf32> to vector<1x256xf32>
    %cst_12 = arith.constant 0.000000e+00 : f32
    %40 = vector.broadcast %cst_12 : f32 to vector<1x256xf32>
    %41 = vector.extract_strided_slice %38 {offsets = [0, 130], sizes = [1, 256], strides = [1, 1]} : vector<1x512xf32> to vector<1x256xf32>
    %42 = arith.addf %40, %41 : vector<1x256xf32>
    %43 = vector.extract_strided_slice %38 {offsets = [0, 128], sizes = [1, 256], strides = [1, 1]} : vector<1x512xf32> to vector<1x256xf32>
    %44 = arith.addf %42, %43 : vector<1x256xf32>
    %45 = vector.extract_strided_slice %38 {offsets = [0, 125], sizes = [1, 256], strides = [1, 1]} : vector<1x512xf32> to vector<1x256xf32>
    %46 = arith.addf %44, %45 : vector<1x256xf32>
    %cst_13 = arith.constant 0.000000e+00 : f32
    %47 = vector.broadcast %cst_13 : f32 to vector<1x256xf32>
    %48 = arith.cmpf ogt, %46, %47 : vector<1x256xf32>
    %49 = arith.extui %48 : vector<1x256xi1> to vector<1x256xi32>
    %50 = arith.sitofp %49 : vector<1x256xi32> to vector<1x256xf32>
    %51 = vector.extract_strided_slice %17 {offsets = [0, 128], sizes = [7, 256], strides = [1, 1]} : vector<9x512xf32> to vector<7x256xf32>
    %cst_14 = arith.constant 0.000000e+00 : f32
    %52 = vector.broadcast %cst_14 : f32 to vector<7x256xf32>
    %53 = arith.maximumf %51, %52 : vector<7x256xf32>
    %cst_15 = arith.constant 1.000000e+00 : f32
    %54 = vector.broadcast %cst_15 : f32 to vector<1x256xf32>
    %55 = arith.subf %54, %50 : vector<1x256xf32>
    %56 = vector.broadcast %55 : vector<1x256xf32> to vector<7x256xf32>
    %57 = arith.mulf %53, %56 : vector<7x256xf32>
    %58 = tpu.concatenate %57, %39 in 0 : vector<7x256xf32>, vector<1x256xf32> -> vector<8x256xf32>
    %c0_16 = arith.constant 0 : index
    %c0_17 = arith.constant 0 : index
    %c0_18 = arith.constant 0 : index
    %59 = vector.load %arg5[%c0_16, %c0_17, %c0_18] : memref<1x8x256xf32, #tpu.memory_space<vmem>>, vector<1x8x256xf32>
    %60 = vector.shape_cast %59 : vector<1x8x256xf32> to vector<8x256xf32>
    %61 = vector.shape_cast %58 : vector<8x256xf32> to vector<1x8x256xf32>
    tpu.vector_store %arg5[%c0_16, %c0_17, %c0_18], %61 {strides = array<i32>} : memref<1x8x256xf32, #tpu.memory_space<vmem>>, vector<1x8x256xf32>,
    %62 = arith.fptosi %50 : vector<1x256xf32> to vector<1x256xi32>
    %c0_19 = arith.constant 0 : index
    %c0_20 = arith.constant 0 : index
    %c0_21 = arith.constant 0 : index
    %63 = vector.load %arg6[%c0_19, %c0_20, %c0_21] : memref<1x1x256xi32, #tpu.memory_space<vmem>>, vector<1x1x256xi32>
    %64 = vector.shape_cast %63 : vector<1x1x256xi32> to vector<1x256xi32>
    %65 = vector.shape_cast %62 : vector<1x256xi32> to vector<1x1x256xi32>
    tpu.vector_store %arg6[%c0_19, %c0_20, %c0_21], %65 {strides = array<i32>} : memref<1x1x256xi32, #tpu.memory_space<vmem>>, vector<1x1x256xi32>,
    return
  }
  func.func @transform_1(%arg0: i32, %arg1: i32) -> (i32, i32) {
    %c0_i32 = arith.constant 0 : i32
    %c0_i32_0 = arith.constant 0 : i32
    %c0_i32_1 = arith.constant 0 : i32
    return %c0_i32, %c0_i32_0 : i32, i32
  }
  func.func @transform_2(%arg0: i32, %arg1: i32) -> (i32, i32) {
    %c0_i32 = arith.constant 0 : i32
    %c0_i32_0 = arith.constant 0 : i32
    %c0_i32_1 = arith.constant 0 : i32
    return %c0_i32, %c0_i32_0 : i32, i32
  }
  func.func @transform_3(%arg0: i32, %arg1: i32) -> (i32, i32, i32) {
    %c0_i32 = arith.constant 0 : i32
    %c0_i32_0 = arith.constant 0 : i32
    return %arg0, %c0_i32, %arg1 : i32, i32, i32
  }
  func.func @transform_4(%arg0: i32, %arg1: i32) -> (i32, i32, i32) {
    %c0_i32 = arith.constant 0 : i32
    %c0_i32_0 = arith.constant 0 : i32
    return %arg0, %c0_i32, %arg1 : i32, i32, i32
  }
}

</mosaic_0001>

<llo_original>
// kernel: tpu_custom_call.1
$region0: #{tpu_custom_call.1}
  #allocation0 [shape = 'u32[]', space=smem, size = 0x4, offset = 0x4, fixed_abs, tag = 'smem constant byte address 0x4 - core index']
  #allocation1 [shape = 'u32[72,128]{1,0:T(1,128)}', space=vmem, size = 0x9000, scoped, tag = 'internal scratch']
  #allocation2 [shape = 'bf16[4,512]{1,0:T(4,128)(2,1)}', space=vmem, size = 0x1000, scoped, tag = 'scratch operand']
  #allocation3 [shape = 's32[1]{0}', space=sflag, size = 0x4, scoped, tag = 'scratch operand']
  #allocation8 [shape = 's32[]', space=sflag, size = 0x4, offset = 0, fixed_abs, tag = 'sflag constant byte address 0x0 - dummy sync flag']
  #allocation9 [shape = 's32[]', space=sflag, size = 0x4, offset = 0, fixed_abs, tag = 'sflag constant byte address 0x0 - dummy sync flag']
  #allocation10 [shape = 'u32[]', space=smem, size = 0x4, offset = 0x44, fixed_abs, tag = 'smem constant byte address 0x44 - assertion arg 0']
  #allocation11 [shape = 'u32[]', space=smem, size = 0x4, offset = 0x48, fixed_abs, tag = 'smem constant byte address 0x48 - assertion arg 1']
  %s0 = inlined_call_operand.hbm [shape: bf16[2,4,768], index: 0, kind: input, shape index: {}]
  %s1 = inlined_call_operand.vmem [shape: f32[9,20], index: 1, kind: input, shape index: {}]
  %s2 = inlined_call_operand.vmem [shape: f32[9,1], index: 2, kind: input, shape index: {}]
  %s3 = inlined_call_operand.hbm [shape: f32[2,8,512], index: 3, kind: output, shape index: {0}]
  %s4 = inlined_call_operand.hbm [shape: s32[2,1,512], index: 4, kind: output, shape index: {1}]
  %5 = xla_tuple %s3, %s4
  %s6 = sld [smem:[#allocation0]]
  $region53: #{tpu_custom_call.1} parent=0
    _
  %s8 = ssub.s32 1, %s6
  %s9 = scalar_select 0, %s8, %s6
  $region1: #{tpu_custom_call.1} parent=0
    #allocation4 [shape = 'u8[16384]{0}', space=vmem, size = 0x4000, scoped, tag = 'output window, operand 0']
    #allocation5 [shape = 's32[2]{0}', space=sflag, size = 0x8, scoped, tag = 'scoped memory for tpu_custom_call.1']
    #allocation6 [shape = 'u8[2048]{0}', space=vmem, size = 0x800, scoped, tag = 'output window, operand 1']
    #allocation7 [shape = 's32[2]{0}', space=sflag, size = 0x8, scoped, tag = 'scoped memory for tpu_custom_call.1']
    %10 = vsyncpa [#allocation5], 0
    %s11 = scalar_lea.sflag [#allocation5], 1
    %12 = vsyncpa %s11, 0
    %13 = vsyncpa [#allocation7], 0
    %s14 = scalar_lea.sflag [#allocation7], 1
    %15 = vsyncpa %s14, 0
    loop: start=0, step=1, limit=6
    $region2: #{tpu_custom_call.1} parent=1 // loop_pre_header
      _
    $region3: #{tpu_custom_call.1} parent=1 // loop_header
      %s17 = sphi 0, %s21
      %p18 = scmp.ge.s32.totalorder %s17, 6
      %s24 = sphi 0, %s36
      %s25 = sphi 0, %s32
      %s26 = sphi 0, %s24
      %s27 = sphi 0, %s25
      %s28 = sphi 0, %s26
      %s29 = sphi 0, %s27
      %s37 = sphi 0, %s37
      %s39 = sphi 0, %s37
      %s40 = sphi 0, %s39
      %s54 = sphi 0, %s40
      %s58 = sphi 0, %s58
      %s60 = sphi 0, %s58
      %s61 = sphi 0, %s60
      %s75 = sphi 0, %s61
      %s83 = sphi 0, %s85
      %s86 = sphi 0, %s83
      %s87 = sphi 0, %s86
      %s103 = sphi 0, %s87
      %s111 = sphi 0, %s113
      %s114 = sphi 0, %s111
      %s115 = sphi 0, %s114
      %s131 = sphi 0, %s115
    $region4: #{tpu_custom_call.1} parent=1 // loop_header_branch
      %20 = sbr.rel (%p18) target = $region8
    $region5: #{tpu_custom_call.1} parent=1 // loop_body
      %s22 = ssub.s32 %s17, 1
      %s23 = ssub.s32 %s17, 2
      %s30 = sadd.s32 1, %s25
      %p31 = scmp.ge.s32.totalorder %s30, 2
      %s32 = scalar_select %p31, 0, %s30
      %s33 = sadd.s32 1, %s24
      %s34 = scalar_select %p31, %s33, %s24
      %p35 = scmp.ge.s32.totalorder %s34, 2
      %s36 = scalar_select %p35, 0, %s34
      %s38 = sadd.s32 %s37, 1
      %p41 = scmp.eq.s32.totalorder %s17, 3
      %p42 = scmp.ne.s32.totalorder %s37, %s39
      %p43 = scmp.eq.s32.totalorder %s17, 0
      %p44 = por %p42, %p43
      %p45 = scmp.ne.s32.totalorder %s37, %s39
      %p46 = scmp.eq.s32.totalorder %s22, 3
      %p47 = por %p45, %p46
      %p48 = scmp.ne.s32.totalorder %s39, %s40
      %p49 = scmp.eq.s32.totalorder %s22, 0
      %p50 = por %p48, %p49
      %p51 = scmp.ne.s32.totalorder %s39, %s40
      %p52 = scmp.eq.s32.totalorder %s23, 3
      %p53 = por %p51, %p52
      %p55 = scmp.ne.s32.totalorder %s40, %s54
      %p56 = scmp.eq.s32.totalorder %s23, 0
      %p57 = por %p55, %p56
      %s59 = sadd.s32 %s58, 1
      %p62 = scmp.eq.s32.totalorder %s17, 3
      %p63 = scmp.ne.s32.totalorder %s58, %s60
      %p64 = scmp.eq.s32.totalorder %s17, 0
      %p65 = por %p63, %p64
      %p66 = scmp.ne.s32.totalorder %s58, %s60
      %p67 = scmp.eq.s32.totalorder %s22, 3
      %p68 = por %p66, %p67
      %p69 = scmp.ne.s32.totalorder %s60, %s61
      %p70 = scmp.eq.s32.totalorder %s22, 0
      %p71 = por %p69, %p70
      %p72 = scmp.ne.s32.totalorder %s60, %s61
      %p73 = scmp.eq.s32.totalorder %s23, 3
      %p74 = por %p72, %p73
      %p76 = scmp.ne.s32.totalorder %s61, %s75
      %p77 = scmp.eq.s32.totalorder %s23, 0
      %p78 = por %p76, %p77
      %s79 = ssub.s32 %s24, %s36
      %s80 = ssub.s32 %s25, %s32
      %s81 = sor.u32 %s79, %s80
      %p82 = scmp.eq.s32.totalorder %s81, 0
      %s84 = sadd.s32 %s83, 1
      %s85 = scalar_select %p82, %s83, %s84
      %p88 = pneg %p82
      %p89 = scmp.eq.s32.totalorder %s17, 3
      %p90 = por %p88, %p89
      %p91 = scmp.ne.s32.totalorder %s83, %s86
      %p92 = scmp.eq.s32.totalorder %s17, 0
      %p93 = por %p91, %p92
      %p94 = scmp.ne.s32.totalorder %s83, %s86
      %p95 = scmp.eq.s32.totalorder %s22, 3
      %p96 = por %p94, %p95
      %p97 = scmp.ne.s32.totalorder %s86, %s87
      %p98 = scmp.eq.s32.totalorder %s22, 0
      %p99 = por %p97, %p98
      %p100 = scmp.ne.s32.totalorder %s86, %s87
      %p101 = scmp.eq.s32.totalorder %s23, 3
      %p102 = por %p100, %p101
      %p104 = scmp.ne.s32.totalorder %s87, %s103
      %p105 = scmp.eq.s32.totalorder %s23, 0
      %p106 = por %p104, %p105
      %s107 = ssub.s32 %s24, %s36
      %s108 = ssub.s32 %s25, %s32
      %s109 = sor.u32 %s107, %s108
      %p110 = scmp.eq.s32.totalorder %s109, 0
      %s112 = sadd.s32 %s111, 1
      %s113 = scalar_select %p110, %s111, %s112
      %p116 = pneg %p110
      %p117 = scmp.eq.s32.totalorder %s17, 3
      %p118 = por %p116, %p117
      %p119 = scmp.ne.s32.totalorder %s111, %s114
      %p120 = scmp.eq.s32.totalorder %s17, 0
      %p121 = por %p119, %p120
      %p122 = scmp.ne.s32.totalorder %s111, %s114
      %p123 = scmp.eq.s32.totalorder %s22, 3
      %p124 = por %p122, %p123
      %p125 = scmp.ne.s32.totalorder %s114, %s115
      %p126 = scmp.eq.s32.totalorder %s22, 0
      %p127 = por %p125, %p126
      %p128 = scmp.ne.s32.totalorder %s114, %s115
      %p129 = scmp.eq.s32.totalorder %s23, 3
      %p130 = por %p128, %p129
      %p132 = scmp.ne.s32.totalorder %s115, %s131
      %p133 = scmp.eq.s32.totalorder %s23, 0
      %p134 = por %p132, %p133
      %p135 = scmp.le.s32.totalorder 1, %s17
      %p136 = scmp.lt.s32.totalorder %s17, 5
      %p137 = pnand %p135, %p136
      %p138 = pneg %p137
      // Predicated region
      $region9: #{tpu_custom_call.1} parent=5 // pred_check
        _
      $region10: #{tpu_custom_call.1} parent=5 // pred_check_branch
        %140 = sbr.rel (%p137) target = $region12
      $region11: #{tpu_custom_call.1} parent=5 // pred_region
        %s141 = ssub.s32 %s17, 1
        // Predicated region
        $region13: #{tpu_custom_call.1} parent=11 // pred_check
          %p142 = pneg %p50
        $region14: #{tpu_custom_call.1} parent=11 // pred_check_branch
          %144 = sbr.rel (%p142) target = $region16
        $region15: #{tpu_custom_call.1} parent=11 // pred_region
          _
        $region16: #{tpu_custom_call.1} parent=11 // pred_fallthru
          _
        // Predicated region
        $region17: #{tpu_custom_call.1} parent=11 // pred_check
          %p145 = pneg %p71
        $region18: #{tpu_custom_call.1} parent=11 // pred_check_branch
          %147 = sbr.rel (%p145) target = $region20
        $region19: #{tpu_custom_call.1} parent=11 // pred_region
          _
        $region20: #{tpu_custom_call.1} parent=11 // pred_fallthru
          _
      $region12: #{tpu_custom_call.1} parent=5 // pred_fallthru
        _
      %p148 = scmp.lt.s32.totalorder %s17, 4
      // Predicated region
      $region21: #{tpu_custom_call.1} parent=5 // pred_check
        %p149 = pneg %p148
      $region22: #{tpu_custom_call.1} parent=5 // pred_check_branch
        %151 = sbr.rel (%p149) target = $region24
      $region23: #{tpu_custom_call.1} parent=5 // pred_region
        _
      $region24: #{tpu_custom_call.1} parent=5 // pred_fallthru
        _
      %p152 = scmp.le.s32.totalorder 1, %s17
      %p153 = scmp.lt.s32.totalorder %s17, 5
      %p154 = pnand %p152, %p153
      %p155 = pneg %p154
      // Predicated region
      $region25: #{tpu_custom_call.1} parent=5 // pred_check
        _
      $region26: #{tpu_custom_call.1} parent=5 // pred_check_branch
        %157 = sbr.rel (%p154) target = $region28
      $region27: #{tpu_custom_call.1} parent=5 // pred_region
        %s158 = ssub.s32 %s17, 1
        %p159 = pneg %p50
        %p160 = pneg %p47
        %p161 = pneg %p71
        %p162 = pneg %p68
        %p163 = pneg %p99
        %p164 = pneg %p96
        %s165 = sand.u32 %s86, 1
        %s166 = scalar_lea.sflag [#allocation5], %s165
        %s167 = sand.u32 %s86, 1
        %s168 = smul.addr %s167, 16
        %s169 = scalar_lea.vmem [#allocation4], %s168
        %p170 = pneg %p127
        %p171 = pneg %p124
        %s172 = sand.u32 %s114, 1
        %s173 = scalar_lea.sflag [#allocation7], %s172
        %s174 = sand.u32 %s114, 1
        %s175 = smul.addr %s174, 2
        %s176 = scalar_lea.vmem [#allocation6], %s175
        %s177 = smul.u32 2, %s27
        %s178 = smul.u32 2, %s27
        %s179 = smul.u32 %s27, 256
        %s180 = sshra.s32 %s179, 7
        %s181 = sand.u32 %s179, 127
        %s182 = smul.u32 %s26, 6
        %s183 = sadd.s32 %s180, %s182
        %s184 = smul.addr %s183, 2
        %s185 = scalar_lea.hbm %s0, %s184
        // Predicated region
        $region29: #{tpu_custom_call.1} parent=27 // pred_check
          _
        $region30: #{tpu_custom_call.1} parent=27 // pred_check_branch
          %187 = sbr.rel target = $region32
        $region31: #{tpu_custom_call.1} parent=27 // pred_region
          %188 = sst [smem:[#allocation10]] [#allocation9]
          %189 = sst [smem:[#allocation11]] [#allocation8]
        $region32: #{tpu_custom_call.1} parent=27 // pred_fallthru
          _
        %191 = shalt.err (0)
        %s193 = sshll.u32 %s185, 4
        %s194 = int_to_ptr.hbm [resolvable:$true] %s193
        %s195 = sshll.u32 [#allocation2], 4
        %s196 = int_to_ptr.vmem [resolvable:$true] %s195
        %198 = dma.hbm_to_vmem [thread:$0]  %s194, 128, %s196, [#allocation3]
        %s199 = smul.u32 2, 1
        %s200 = smul.u32 %s199, 4
        %s201 = sshll.u32 %s200, 4
        %202 = dma.done [#allocation3], %s201
        %v203 = vld [vmem:[#allocation2] sm:$0xff]
        %v204 = vunpack.c.l.bf16 %v203
        %v205 = vunpack.c.h.bf16 %v203
        %208 = vst [vmem:[#allocation1] ss:$2 sm:$0xff] %v204
        %s209 = scalar_lea.vmem [#allocation1], 16
        %210 = vst [vmem:[%s209] ss:$2 sm:$0xff] %v205
        %v211 = vld.sshfl [vmem:[#allocation1] sm:$0xff pattern:$0x75316420]
        %v212 = vld.sshfl [vmem:[#allocation1 + $0x8] sm:$0xff pattern:$0x75316420]
        %v213 = vld.sshfl [vmem:[#allocation1 + $0x10] sm:$0xff pattern:$0x75316420]
        %v214 = vld.sshfl [vmem:[#allocation1 + $0x18] sm:$0xff pattern:$0x75316420]
        %219 = vrot.lane.b32.xlu0 %v211, 2
        %v220 = vpop.permute.xlu0 %219
        %221 = vrot.lane.b32.xlu0 %v212, 2
        %v222 = vpop.permute.xlu0 %221
        %223 = vrot.lane.b32.xlu0 %v213, 2
        %v224 = vpop.permute.xlu0 %223
        %225 = vrot.lane.b32.xlu0 %v214, 2
        %v226 = vpop.permute.xlu0 %225
        %v227 = vlaneseq
        %v228 = vand.u32 %v227, 127
        %vm229 = vcmp.lt.s32.totalorder %v228, 2
        %v230 = vsel %vm229, %v224, %v226
        %v231 = vsel %vm229, %v222, %v224
        %v232 = vsel %vm229, %v220, %v222
        %v233 = vsel %vm229, %v226, %v220
        %234 = vst [vmem:[#allocation1] ss:$2 sm:$0xff] %v204
        %s235 = scalar_lea.vmem [#allocation1], 16
        %236 = vst [vmem:[%s235] ss:$2 sm:$0xff] %v205
        %v237 = vld.sshfl [vmem:[#allocation1] sm:$0xff pattern:$0x75316420]
        %v238 = vld.sshfl [vmem:[#allocation1 + $0x8] sm:$0xff pattern:$0x75316420]
        %v239 = vld.sshfl [vmem:[#allocation1 + $0x10] sm:$0xff pattern:$0x75316420]
        %v240 = vld.sshfl [vmem:[#allocation1 + $0x18] sm:$0xff pattern:$0x75316420]
        %245 = vrot.lane.b32.xlu0 %v237, 1
        %v246 = vpop.permute.xlu0 %245
        %247 = vrot.lane.b32.xlu0 %v238, 1
        %v248 = vpop.permute.xlu0 %247
        %249 = vrot.lane.b32.xlu0 %v239, 1
        %v250 = vpop.permute.xlu0 %249
        %251 = vrot.lane.b32.xlu0 %v240, 1
        %v252 = vpop.permute.xlu0 %251
        %vm253 = vcmp.lt.s32.totalorder %v228, 1
        %v254 = vsel %vm253, %v250, %v252
        %v255 = vsel %vm253, %v248, %v250
        %v256 = vsel %vm253, %v246, %v248
        %v257 = vsel %vm253, %v252, %v246
        %258 = vst [vmem:[#allocation1] ss:$2 sm:$0xff] %v204
        %s259 = scalar_lea.vmem [#allocation1], 16
        %260 = vst [vmem:[%s259] ss:$2 sm:$0xff] %v205
        %v261 = vld.sshfl [vmem:[#allocation1] sm:$0xff pattern:$0x75316420]
        %v262 = vld.sshfl [vmem:[#allocation1 + $0x8] sm:$0xff pattern:$0x75316420]
        %v263 = vld.sshfl [vmem:[#allocation1 + $0x10] sm:$0xff pattern:$0x75316420]
        %v264 = vld.sshfl [vmem:[#allocation1 + $0x18] sm:$0xff pattern:$0x75316420]
        %269 = vrot.lane.b32.xlu0 %v261, 127
        %v270 = vpop.permute.xlu0 %269
        %271 = vrot.lane.b32.xlu0 %v262, 127
        %v272 = vpop.permute.xlu0 %271
        %273 = vrot.lane.b32.xlu0 %v263, 127
        %v274 = vpop.permute.xlu0 %273
        %275 = vrot.lane.b32.xlu0 %v264, 127
        %v276 = vpop.permute.xlu0 %275
        %vm277 = vcmp.lt.s32.totalorder %v228, 127
        %v278 = vsel %vm277, %v274, %v276
        %v279 = vsel %vm277, %v272, %v274
        %v280 = vsel %vm277, %v270, %v272
        %v281 = vsel %vm277, %v276, %v270
        %282 = vst [vmem:[#allocation1] ss:$2 sm:$0xff] %v204
        %s283 = scalar_lea.vmem [#allocation1], 16
        %284 = vst [vmem:[%s283] ss:$2 sm:$0xff] %v205
        %v285 = vld.sshfl [vmem:[#allocation1] sm:$0xff pattern:$0x75316420]
        %v286 = vld.sshfl [vmem:[#allocation1 + $0x8] sm:$0xff pattern:$0x75316420]
        %v287 = vld.sshfl [vmem:[#allocation1 + $0x10] sm:$0xff pattern:$0x75316420]
        %v288 = vld.sshfl [vmem:[#allocation1 + $0x18] sm:$0xff pattern:$0x75316420]
        %293 = vrot.lane.b32.xlu0 %v285, 126
        %v294 = vpop.permute.xlu0 %293
        %295 = vrot.lane.b32.xlu0 %v286, 126
        %v296 = vpop.permute.xlu0 %295
        %297 = vrot.lane.b32.xlu0 %v287, 126
        %v298 = vpop.permute.xlu0 %297
        %299 = vrot.lane.b32.xlu0 %v288, 126
        %v300 = vpop.permute.xlu0 %299
        %vm301 = vcmp.lt.s32.totalorder %v228, 126
        %v302 = vsel %vm301, %v298, %v300
        %v303 = vsel %vm301, %v296, %v298
        %v304 = vsel %vm301, %v294, %v296
        %v305 = vsel %vm301, %v300, %v294
        %v310 = vrot.slane %v257, 4
        %v311 = vrot.slane %v256, 4
        %v312 = vrot.slane %v255, 4
        %v313 = vrot.slane %v254, 4
        %318 = vst [vmem:[#allocation1] ss:$2 sm:$0xff] %v204
        %s319 = scalar_lea.vmem [#allocation1], 16
        %320 = vst [vmem:[%s319] ss:$2 sm:$0xff] %v205
        %v321 = vld.sshfl [vmem:[#allocation1] sm:$0xff pattern:$0x75316420]
        %v322 = vld.sshfl [vmem:[#allocation1 + $0x8] sm:$0xff pattern:$0x75316420]
        %v323 = vld.sshfl [vmem:[#allocation1 + $0x10] sm:$0xff pattern:$0x75316420]
        %v324 = vld.sshfl [vmem:[#allocation1 + $0x18] sm:$0xff pattern:$0x75316420]
        %v333 = vrot.slane %v280, 4
        %v334 = vrot.slane %v279, 4
        %v335 = vrot.slane %v278, 4
        %v336 = vrot.slane %v281, 4
        %vm341 = vcmask 1043456
        %v342 = vsel %vm341, %v233, %v310
        %v343 = vsel %vm341, %v232, %v311
        %v344 = vsel %vm341, %v231, %v312
        %v345 = vsel %vm341, %v230, %v313
        %v346 = vsel %vm341, %v321, %v333
        %v347 = vsel %vm341, %v322, %v334
        %v348 = vsel %vm341, %v323, %v335
        %v349 = vsel %vm341, %v324, %v336
        %v350 = vld [vmem:[%s1] sm:$0xff]
        %v351 = vld [vmem:[%s1 + $0x8] sm:$0x1]
        %v352 = vld [vmem:[%s2] sm:$0xff]
        %v353 = vld [vmem:[%s2 + $0x8] sm:$0x1]
        %355 = vset.pattern.permute.xlu0 0
        %356 = vperm.xlu0 %355, %v352
        %v357 = vpop.permute.xlu0 %356
        %360 = vset.pattern.permute.xlu0 0
        %361 = vperm.xlu0 %360, %v353
        %v362 = vpop.permute.xlu0 %361
        %vm364 = vcmask 162816
        %v366 = vsel %vm364, %v350, 0
        %v369 = vsel %vm364, %v351, 0
        %v372 = vsel %vm341, %v304, 0
        %v375 = vsel %vm341, %v303, 0
        %v378 = vsel %vm341, %v302, 0
        %v381 = vsel %vm341, %v305, 0
        %383 = vmatpush.msra.mxu0 0.0
        %384 = vmatpush.msra.mxu0 0.0
        %385 = vmatpush.msra.mxu0 0.0
        %386 = vmatpush.msra.mxu0 0.0
        %387 = vmatpush.msra.mxu0 0.0
        %388 = vmatpush.msra.mxu0 0.0
        %389 = vmatpush.msra.mxu0 0.0
        %390 = vmatpush.msra.mxu0 0.0
        %391 = vmatpush.msra.mxu0 0.0
        %392 = vmatpush.msra.mxu0 0.0
        %393 = vmatpush.msra.mxu0 0.0
        %394 = vmatpush.msra.mxu0 0.0
        %395 = vmatpush.msra.mxu0 0.0
        %396 = vmatpush.msra.mxu0 %v372
        %397 = vmatpush.msra.mxu0 %v346
        %398 = vmatpush.msra.mxu0 %v342
        %399 = vmatmul.f32.gmra.mxu0 %v366
        %v400 = vpop.f32.mrf.mxu0
        %401 = vmatmul.f32.gmra.mxu0 %v369
        %v402 = vpop.f32.mrf.mxu0
        %v403 = vadd.f32 %v362, %v402
        %404 = vdwg.mxu0
        %405 = vmatpush.msra.mxu0 0.0
        %406 = vmatpush.msra.mxu0 0.0
        %407 = vmatpush.msra.mxu0 0.0
        %408 = vmatpush.msra.mxu0 0.0
        %409 = vmatpush.msra.mxu0 0.0
        %410 = vmatpush.msra.mxu0 0.0
        %411 = vmatpush.msra.mxu0 0.0
        %412 = vmatpush.msra.mxu0 0.0
        %413 = vmatpush.msra.mxu0 0.0
        %414 = vmatpush.msra.mxu0 0.0
        %415 = vmatpush.msra.mxu0 0.0
        %416 = vmatpush.msra.mxu0 0.0
        %417 = vmatpush.msra.mxu0 0.0
        %418 = vmatpush.msra.mxu0 %v375
        %419 = vmatpush.msra.mxu0 %v347
        %420 = vmatpush.msra.mxu0 %v343
        %421 = vmatmul.f32.gmra.mxu0 %v366
        %v422 = vpop.f32.mrf.mxu0
        %v423 = vadd.f32 %v357, %v422
        %424 = vmatmul.f32.gmra.mxu0 %v369
        %v425 = vpop.f32.mrf.mxu0
        %v426 = vadd.f32 %v362, %v425
        %427 = vdwg.mxu0
        %428 = vmatpush.msra.mxu0 0.0
        %429 = vmatpush.msra.mxu0 0.0
        %430 = vmatpush.msra.mxu0 0.0
        %431 = vmatpush.msra.mxu0 0.0
        %432 = vmatpush.msra.mxu0 0.0
        %433 = vmatpush.msra.mxu0 0.0
        %434 = vmatpush.msra.mxu0 0.0
        %435 = vmatpush.msra.mxu0 0.0
        %436 = vmatpush.msra.mxu0 0.0
        %437 = vmatpush.msra.mxu0 0.0
        %438 = vmatpush.msra.mxu0 0.0
        %439 = vmatpush.msra.mxu0 0.0
        %440 = vmatpush.msra.mxu0 0.0
        %441 = vmatpush.msra.mxu0 %v378
        %442 = vmatpush.msra.mxu0 %v348
        %443 = vmatpush.msra.mxu0 %v344
        %444 = vmatmul.f32.gmra.mxu0 %v366
        %v445 = vpop.f32.mrf.mxu0
        %v446 = vadd.f32 %v357, %v445
        %447 = vmatmul.f32.gmra.mxu0 %v369
        %v448 = vpop.f32.mrf.mxu0
        %v449 = vadd.f32 %v362, %v448
        %450 = vdwg.mxu0
        %451 = vmatpush.msra.mxu0 0.0
        %452 = vmatpush.msra.mxu0 0.0
        %453 = vmatpush.msra.mxu0 0.0
        %454 = vmatpush.msra.mxu0 0.0
        %455 = vmatpush.msra.mxu0 0.0
        %456 = vmatpush.msra.mxu0 0.0
        %457 = vmatpush.msra.mxu0 0.0
        %458 = vmatpush.msra.mxu0 0.0
        %459 = vmatpush.msra.mxu0 0.0
        %460 = vmatpush.msra.mxu0 0.0
        %461 = vmatpush.msra.mxu0 0.0
        %462 = vmatpush.msra.mxu0 0.0
        %463 = vmatpush.msra.mxu0 0.0
        %464 = vmatpush.msra.mxu0 %v381
        %465 = vmatpush.msra.mxu0 %v349
        %466 = vmatpush.msra.mxu0 %v345
        %467 = vmatmul.f32.gmra.mxu0 %v366
        %v468 = vpop.f32.mrf.mxu0
        %469 = vmatmul.f32.gmra.mxu0 %v369
        %v470 = vpop.f32.mrf.mxu0
        %v471 = vadd.f32 %v362, %v470
        %472 = vdwg.mxu0
        %v473 = vsub.f32 %v403, -10.0
        %v474 = vsub.f32 %v426, -10.0
        %v475 = vsub.f32 %v449, -10.0
        %v476 = vsub.f32 %v471, -10.0
        %v477 = vmax.f32 %v473, 0.0
        %v478 = vmax.f32 %v474, 0.0
        %v479 = vmax.f32 %v475, 0.0
        %v480 = vmax.f32 %v476, 0.0
        %v481 = vadd.s32 %v228, 128
        %v482 = vadd.s32 %v228, 256
        %v483 = vadd.s32 %v228, 384
        %s484 = ssub.s32 %s179, 128
        %v485 = vstv %s484
        %v486 = vadd.s32 %v228, %v485
        %v487 = vadd.s32 %v481, %v485
        %v488 = vadd.s32 %v482, %v485
        %v489 = vadd.s32 %v483, %v485
        %vm490 = vcmp.ge.s32.totalorder %v486, 0
        %vm491 = vcmp.ge.s32.totalorder %v487, 0
        %vm492 = vcmp.ge.s32.totalorder %v488, 0
        %vm493 = vcmp.ge.s32.totalorder %v489, 0
        %vm494 = vcmp.lt.s32.totalorder %v486, 512
        %vm495 = vcmp.lt.s32.totalorder %v487, 512
        %vm496 = vcmp.lt.s32.totalorder %v488, 512
        %vm497 = vcmp.lt.s32.totalorder %v489, 512
        %vm498 = vmand %vm490, %vm494
        %vm499 = vmand %vm491, %vm495
        %vm500 = vmand %vm492, %vm496
        %vm501 = vmand %vm493, %vm497
        %v502 = vsel %vm498, %v477, 0.0
        %v503 = vsel %vm499, %v478, 0.0
        %v504 = vsel %vm500, %v479, 0.0
        %v505 = vsel %vm501, %v480, 0.0
        %vm506 = vcmp.gt.f32.partialorder %v502, 10.05
        %vm507 = vcmp.gt.f32.partialorder %v503, 10.05
        %vm508 = vcmp.gt.f32.partialorder %v504, 10.05
        %vm509 = vcmp.gt.f32.partialorder %v505, 10.05
        %v510 = vsel %vm506, 1, 0
        %v511 = vsel %vm507, 1, 0
        %v512 = vsel %vm508, 1, 0
        %v513 = vsel %vm509, 1, 0
        %v514 = vcvt.s32.f32 %v510
        %v515 = vcvt.s32.f32 %v511
        %v516 = vcvt.s32.f32 %v512
        %v517 = vcvt.s32.f32 %v513
        %v518 = vadd.f32 %v515, 0.0
        %v519 = vadd.f32 %v516, 0.0
        %v520 = vadd.f32 %v517, 0.0
        %523 = vrot.lane.b32.xlu0 %v515, 2
        %v524 = vpop.permute.xlu0 %523
        %525 = vrot.lane.b32.xlu0 %v516, 2
        %v526 = vpop.permute.xlu0 %525
        %vm527 = vcmask 15360
        %v528 = vsel %vm527, %v524, %v526
        %v532 = vadd.f32 %v518, %v524
        %v533 = vadd.f32 %v519, %v528
        %v534 = vadd.f32 %v520, %v526
        %536 = vrot.lane.b32.xlu0 %v514, 5
        %v537 = vpop.permute.xlu0 %536
        %538 = vrot.lane.b32.xlu0 %v515, 5
        %v539 = vpop.permute.xlu0 %538
        %540 = vrot.lane.b32.xlu0 %v516, 5
        %v541 = vpop.permute.xlu0 %540
        %vm542 = vcmask 39936
        %v543 = vsel %vm542, %v537, %v539
        %v544 = vsel %vm542, %v539, %v541
        %v548 = vadd.f32 %v532, %v543
        %v549 = vadd.f32 %v533, %v544
        %v550 = vadd.f32 %v534, %v541
        %vm551 = vcmp.gt.f32.partialorder %v548, 0.0
        %vm552 = vcmp.gt.f32.partialorder %v549, 0.0
        %vm553 = vcmp.gt.f32.partialorder %v550, 0.0
        %v554 = vsel %vm551, 1, 0
        %v555 = vsel %vm552, 1, 0
        %v556 = vsel %vm553, 1, 0
        %v557 = vcvt.s32.f32 %v554
        %v558 = vcvt.s32.f32 %v555
        %v559 = vcvt.s32.f32 %v556
        %v560 = vmax.f32 %v423, 0.0
        %v561 = vmax.f32 %v446, 0.0
        %v562 = vsub.f32 1.0, %v557
        %v563 = vsub.f32 1.0, %v558
        %v564 = vsub.f32 1.0, %v559
        %v565 = vperm.slane %v562, 0
        %v566 = vperm.slane %v563, 0
        %v567 = vperm.slane %v564, 0
        %571 = vrot.lane.b32.xlu0 %v565, 126
        %v572 = vpop.permute.xlu0 %571
        %573 = vrot.lane.b32.xlu0 %v566, 126
        %v574 = vpop.permute.xlu0 %573
        %575 = vrot.lane.b32.xlu0 %v567, 126
        %v576 = vpop.permute.xlu0 %575
        %vm577 = vcmask 1031168
        %v578 = vsel %vm577, %v572, %v574
        %v579 = vsel %vm577, %v574, %v576
        %v582 = vmul.f32 %v560, %v578
        %v583 = vmul.f32 %v561, %v579
        %v587 = vrot.slane %v502, 1
        %v588 = vrot.slane %v503, 1
        %v589 = vrot.slane %v504, 1
        %590 = vrot.lane.b32.xlu0 %v587, 2
        %v591 = vpop.permute.xlu0 %590
        %592 = vrot.lane.b32.xlu0 %v588, 2
        %v593 = vpop.permute.xlu0 %592
        %594 = vrot.lane.b32.xlu0 %v589, 2
        %v595 = vpop.permute.xlu0 %594
        %v596 = vsel %vm527, %v591, %v593
        %v597 = vsel %vm527, %v593, %v595
        %vm600 = vcmask 1046528
        %v601 = vsel %vm600, %v582, %v596
        %v602 = vsel %vm600, %v583, %v597
        %603 = vst [vmem:[%s169] sm:$0xff] %v601
        %604 = vst [vmem:[%s169 + $0x8] sm:$0xff] %v602
        %v605 = vcvt.f32.s32.to.zero.pseudo %v557
        %v606 = vcvt.f32.s32.to.zero.pseudo %v558
        %v607 = vcvt.f32.s32.to.zero.pseudo %v559
        %v608 = vrot.slane %v606, 7
        %v609 = vrot.slane %v607, 6
        %vm610 = vcmask 1040384
        %v611 = vsel %vm610, %v605, %v608
        %vm612 = vcmask 1041408
        %v613 = vsel %vm612, %v611, %v609
        %614 = vrot.lane.b32.xlu0 %v613, 126
        %v615 = vpop.permute.xlu0 %614
        %v616 = vrot.slane %v615, 1
        %v617 = vsel %vm577, %v615, %v616
        %v618 = vlaneseq
        %vm619 = vcmp.ge.s32.totalorder %v618, 0
        %vm620 = vcmp.lt.s32.totalorder %v618, 256
        %vm621 = vmand %vm619, %vm620
        %622 = vst.msk [vmem:[%s176] sm:$0x3] %vm621, %v617
        %s623 = sand.u32 %s86, 1
        %s624 = scalar_lea.sflag [#allocation5], %s623
        %s625 = sand.u32 %s86, 1
        %s626 = smul.addr %s625, 16
        %s627 = scalar_lea.vmem [#allocation4], %s626
        %s628 = sand.u32 %s114, 1
        %s629 = scalar_lea.sflag [#allocation7], %s628
        %s630 = sand.u32 %s114, 1
        %s631 = smul.addr %s630, 2
        %s632 = scalar_lea.vmem [#allocation6], %s631
        // Predicated region
        $region33: #{tpu_custom_call.1} parent=27 // pred_check
          %p633 = pneg %p96
        $region34: #{tpu_custom_call.1} parent=27 // pred_check_branch
          %635 = sbr.rel (%p633) target = $region36
        $region35: #{tpu_custom_call.1} parent=27 // pred_region
          %s636 = smul.u32 2, %s27
          %638 = vsyncadd %s624, 0
          %s639 = smul.addr %s26, 4
          %s640 = sadd.s32 %s636, %s639
          %s641 = smul.addr %s640, 8
          %s642 = scalar_lea.hbm %s3, %s641
          %s644 = sshll.u32 %s627, 4
          %s645 = int_to_ptr.vmem [resolvable:$true] %s644
          %s646 = sshll.u32 %s642, 4
          %s647 = int_to_ptr.hbm [resolvable:$true] %s646
          %649 = dma.vmem_to_hbm [thread:$0]  %s645, 256, %s647, %s624
        $region36: #{tpu_custom_call.1} parent=27 // pred_fallthru
          _
        // Predicated region
        $region37: #{tpu_custom_call.1} parent=27 // pred_check
          %p650 = pneg %p124
        $region38: #{tpu_custom_call.1} parent=27 // pred_check_branch
          %652 = sbr.rel (%p650) target = $region40
        $region39: #{tpu_custom_call.1} parent=27 // pred_region
          %s653 = smul.u32 2, %s27
          %655 = vsyncadd %s629, 0
          %s656 = smul.addr %s26, 4
          %s657 = sadd.s32 %s653, %s656
          %s658 = scalar_lea.hbm %s4, %s657
          %s660 = sshll.u32 %s632, 4
          %s661 = int_to_ptr.vmem [resolvable:$true] %s660
          %s662 = sshll.u32 %s658, 4
          %s663 = int_to_ptr.hbm [resolvable:$true] %s662
          %665 = dma.vmem_to_hbm [thread:$0]  %s661, 32, %s663, %s629
        $region40: #{tpu_custom_call.1} parent=27 // pred_fallthru
          _
      $region28: #{tpu_custom_call.1} parent=5 // pred_fallthru
        _
      %p666 = scmp.le.s32.totalorder 2, %s17
      // Predicated region
      $region41: #{tpu_custom_call.1} parent=5 // pred_check
        %p667 = pneg %p666
      $region42: #{tpu_custom_call.1} parent=5 // pred_check_branch
        %669 = sbr.rel (%p667) target = $region44
      $region43: #{tpu_custom_call.1} parent=5 // pred_region
        %s670 = ssub.s32 %s17, 2
        // Predicated region
        $region45: #{tpu_custom_call.1} parent=43 // pred_check
          %p671 = pneg %p102
        $region46: #{tpu_custom_call.1} parent=43 // pred_check_branch
          %673 = sbr.rel (%p671) target = $region48
        $region47: #{tpu_custom_call.1} parent=43 // pred_region
          %s674 = sand.u32 %s87, 1
          %s675 = scalar_lea.sflag [#allocation5], %s674
          %s676 = sand.u32 %s87, 1
          %s677 = smul.addr %s676, 16
          %s678 = scalar_lea.vmem [#allocation4], %s677
          %680 = dma.done %s675, 256
        $region48: #{tpu_custom_call.1} parent=43 // pred_fallthru
          _
        // Predicated region
        $region49: #{tpu_custom_call.1} parent=43 // pred_check
          %p681 = pneg %p130
        $region50: #{tpu_custom_call.1} parent=43 // pred_check_branch
          %683 = sbr.rel (%p681) target = $region52
        $region51: #{tpu_custom_call.1} parent=43 // pred_region
          %s684 = sand.u32 %s115, 1
          %s685 = scalar_lea.sflag [#allocation7], %s684
          %s686 = sand.u32 %s115, 1
          %s687 = smul.addr %s686, 2
          %s688 = scalar_lea.vmem [#allocation6], %s687
          %690 = dma.done %s685, 32
        $region52: #{tpu_custom_call.1} parent=43 // pred_fallthru
          _
      $region44: #{tpu_custom_call.1} parent=5 // pred_fallthru
        _
    $region6: #{tpu_custom_call.1} parent=1 // loop_footer
      %s21 = sadd.s32 1, %s17
    $region7: #{tpu_custom_call.1} parent=1 // loop_footer_branch
      %16 = sbr.rel target = $region3
    $region8: #{tpu_custom_call.1} parent=1 // loop_exit
      _
    %691 = vsyncpa [#allocation5], 1
    %s692 = scalar_lea.sflag [#allocation5], 1
    %693 = vsyncpa %s692, 1
    %694 = vsyncpa [#allocation7], 1
    %s695 = scalar_lea.sflag [#allocation7], 1
    %696 = vsyncpa %s695, 1
  %697 = vsyncmov [#allocation3]
  %s698 = vpop.sfrf %697
  %p699 = scmp.eq.s32.totalorder %s698, 0
  %p700 = pneg %p699
  %702 = shalt.err (%p700)

</llo_original>
